<compile_context>
chip_gen: v7x
topology: tpu7x:2x2x1
jax: 0.10.0
libtpu: 0.0.40
codegen_flags: <defaults>
</compile_context>

<pallas_src>
import jax
import jax.numpy as jnp
from jax.experimental import pallas as pl
from jax.experimental.pallas import tpu as pltpu


def _round_up(n, m):
    return (n + m - 1) // m * m


def qnet_kernel(x_ref, w1_ref, b1_ref, w2_ref, b2_ref, o_ref):
    # In-kernel cast of x to the MXU operand dtype (no-op for fp32; VPU cast for
    # bf16).  Keeps the wrapper from doing an extra HBM pass over x.
    x = x_ref[...].astype(w1_ref.dtype)
    # fc1 on the MXU, fp32 accumulation regardless of operand dtype.
    h = jnp.dot(x, w1_ref[...], preferred_element_type=jnp.float32)
    h = jnp.maximum(h + b1_ref[...], 0.0)                      # bias + ReLU (VPU, fp32)
    # fc2 (out_dim == 1): broadcast-multiply + lane-sum instead of a 1-wide matmul.
    q = jnp.sum(h * w2_ref[...], axis=-1, keepdims=True) + b2_ref[...]   # [TB, 1]
    o_ref[...] = q.astype(o_ref.dtype)


def prepare_params(w1, b1, w2, b2):
    """Zero-pad params along the hidden dim only (feature dim D is NOT padded).

    w1: [D, H] (x @ w1 layout == torch's x @ fc1.weight.T), b1: [H],
    w2: [H] (fc2.weight[0]), b2: scalar.
    Returns w1p: [D, Hp], b1p: [1, Hp], w2p: [1, Hp], b2p: [1, 1].
    Padded hidden units are exact zeros: bias 0 -> ReLU 0 -> fc2 weight 0.
    """
    D, H = w1.shape
    # v6e/v7x MXU tiles are 256 wide; pad to 256 once H exceeds 128 (128 is fine
    # for small H and for v5e).
    Hp = _round_up(H, 128) if H <= 128 else _round_up(H, 256)
    w1p = jnp.zeros((D, Hp), jnp.float32).at[:, :H].set(w1)
    b1p = jnp.zeros((1, Hp), jnp.float32).at[0, :H].set(b1)
    w2p = jnp.zeros((1, Hp), jnp.float32).at[0, :H].set(w2)
    b2p = jnp.asarray(b2, jnp.float32).reshape(1, 1)
    return w1p, b1p, w2p, b2p


def _choose_tb(B, D, Hp, block_batch):
    """Batch tile: multiple of 8, <= block_batch, >=4 grid steps for mid-size B,
    capped by a VMEM budget safe under v5e's 16 MiB scoped-VMEM default."""
    tb = min(int(block_batch), _round_up(pl.cdiv(B, 4), 8))
    tb = max(8, tb)
    # x double-buffer (fp32 stream) + fp32 h temp + slack, kept under ~12 MiB.
    per_row_bytes = 2 * D * 4 + Hp * 4 + 64
    cap = max(8, ((12 * 1024 * 1024) // per_row_bytes) // 8 * 8)
    return min(tb, cap)


def qnet_forward(features, w1p, b1p, w2p, b2p, *, block_batch=1024,
                 mxu_dtype=jnp.float32):
    """features: [B, D] fp32. Returns [B, 1] fp32 == fc2(relu(fc1(x))).

    mxu_dtype=jnp.bfloat16 uses bf16 MXU operands with fp32 accumulation
    (recommended on v5e); x itself is cast inside the kernel, so HBM traffic for
    x is unchanged and only w1 is pre-cast (tiny, one-time).
    """
    B, D = features.shape
    Dw, Hp = w1p.shape
    assert Dw == D, f"feature dim mismatch: x has D={D}, w1 has D={Dw}"

    TB = _choose_tb(B, D, Hp, block_batch)
    grid = (pl.cdiv(B, TB),)          # tail block clipped; OOB rows dropped on store

    w1 = w1p.astype(mxu_dtype)        # one-time tiny cast; x cast in-kernel

    out = pl.pallas_call(
        qnet_kernel,
        out_shape=jax.ShapeDtypeStruct((B, 1), jnp.float32),
        grid=grid,
        in_specs=[
            pl.BlockSpec((TB, D), lambda i: (i, 0)),    # x streamed; D = full dim (no pad)
            pl.BlockSpec((D, Hp), lambda i: (0, 0)),    # VMEM-resident weights
            pl.BlockSpec((1, Hp), lambda i: (0, 0)),
            pl.BlockSpec((1, Hp), lambda i: (0, 0)),
            pl.BlockSpec((1, 1), lambda i: (0, 0)),
        ],
        out_specs=pl.BlockSpec((TB, 1), lambda i: (i, 0)),
        compiler_params=pltpu.CompilerParams(
            dimension_semantics=("parallel",),          # shards batch across v7x TCs
        ),
    )(features, w1, b1p, w2p, b2p)
    return out


def init_params(key, net_arch):
    """Synthetic params matching torch.nn.Linear's default uniform init."""
    D, H, O = net_arch
    assert O == 1
    k1, k2, k3, k4 = jax.random.split(key, 4)
    bound1 = 1.0 / (D ** 0.5)
    bound2 = 1.0 / (H ** 0.5)
    w1 = jax.random.uniform(k1, (D, H), jnp.float32, -bound1, bound1)  # fc1.weight.T
    b1 = jax.random.uniform(k2, (H,), jnp.float32, -bound1, bound1)
    w2 = jax.random.uniform(k3, (H,), jnp.float32, -bound2, bound2)    # fc2.weight[0]
    b2 = jax.random.uniform(k4, (), jnp.float32, -bound2, bound2)
    return w1, b1, w2, b2


def _reference(features, w1, b1, w2, b2):
    h = jnp.maximum(features @ w1 + b1[None, :], 0.0)
    return h @ w2[:, None] + b2


if __name__ == "__main__":
    net_arch = [150, 75, 1]  # assert len == 3 and net_arch[2] == 1, as in the module
    batch = 8

    key = jax.random.PRNGKey(0)
    kx, kp = jax.random.split(key)
    features = jax.random.normal(kx, (batch, net_arch[0]), jnp.float32)
    w1, b1, w2, b2 = init_params(kp, net_arch)
    w1p, b1p, w2p, b2p = prepare_params(w1, b1, w2, b2)

    # Small-batch, fp32 path (exact semantics, single grid step).
    out = jax.block_until_ready(qnet_forward(features, w1p, b1p, w2p, b2p))
    ref = _reference(features, w1, b1, w2, b2)
    assert out.shape == (batch, 1)
    assert jnp.allclose(out, ref, atol=1e-4, rtol=1e-4)

    # Mid-size batch exercising the multi-step grid and the clipped tail block
    # (B=300 -> TB=80, grid=4, no materialized batch padding).
    B2 = 300
    feats2 = jax.random.normal(jax.random.PRNGKey(1), (B2, net_arch[0]), jnp.float32)
    out2 = jax.block_until_ready(qnet_forward(feats2, w1p, b1p, w2p, b2p))
    ref2 = _reference(feats2, w1, b1, w2, b2)
    assert out2.shape == (B2, 1)
    assert jnp.allclose(out2, ref2, atol=1e-4, rtol=1e-4)

    # bf16 MXU-operand path (fp32 accumulate, in-kernel x cast; loose check).
    out3 = jax.block_until_ready(
        qnet_forward(feats2, w1p, b1p, w2p, b2p, mxu_dtype=jnp.bfloat16))
    assert out3.shape == (B2, 1)
    assert jnp.allclose(out3, ref2, atol=5e-2)

    print("KERNEL_OK")
</pallas_src>

<mosaic_0001>
module attributes {stable_mosaic.version = 11 : i64} {
  func.func @qnet_kernel(%arg0: i32, %arg1: memref<8x150xf32, #tpu.memory_space<vmem>>, %arg2: memref<150x128xf32, #tpu.memory_space<vmem>>, %arg3: memref<1x128xf32, #tpu.memory_space<vmem>>, %arg4: memref<1x128xf32, #tpu.memory_space<vmem>>, %arg5: memref<1x1xf32, #tpu.memory_space<vmem>>, %arg6: memref<8x1xf32, #tpu.memory_space<vmem>>) attributes {dimension_semantics = [#tpu.dimension_semantics<parallel>], iteration_bounds = array<i64: 1>, scalar_prefetch = 0 : i64, scratch_operands = 0 : i64, tpu.core_type = #tpu.core_type<tc>, window_params = [{transform_indices = @transform_0, window_bounds = array<i64: 8, 150>}, {pipeline_mode = #tpu.pipeline_mode<synchronous>, transform_indices = @transform_1, window_bounds = array<i64: 150, 128>}, {pipeline_mode = #tpu.pipeline_mode<synchronous>, transform_indices = @transform_2, window_bounds = array<i64: 1, 128>}, {pipeline_mode = #tpu.pipeline_mode<synchronous>, transform_indices = @transform_3, window_bounds = array<i64: 1, 128>}, {pipeline_mode = #tpu.pipeline_mode<synchronous>, transform_indices = @transform_4, window_bounds = array<i64: 1, 1>}, {transform_indices = @transform_5, window_bounds = array<i64: 8, 1>}]} {
    %c0 = arith.constant 0 : index
    %c0_0 = arith.constant 0 : index
    %0 = vector.load %arg1[%c0, %c0_0] : memref<8x150xf32, #tpu.memory_space<vmem>>, vector<8x150xf32>
    %c0_1 = arith.constant 0 : index
    %c0_2 = arith.constant 0 : index
    %1 = vector.load %arg2[%c0_1, %c0_2] : memref<150x128xf32, #tpu.memory_space<vmem>>, vector<150x128xf32>
    %cst = arith.constant dense<0.000000e+00> : vector<8x128xf32>
    %2 = tpu.matmul %0, %1, %cst {dimension_numbers = #tpu.dot_dimension_numbers<[1], [0], [0], [1], [0, 0, 1, 1], [], []>} : vector<8x150xf32>, vector<150x128xf32>, vector<8x128xf32> -> vector<8x128xf32>
    %c0_3 = arith.constant 0 : index
    %c0_4 = arith.constant 0 : index
    %3 = vector.load %arg3[%c0_3, %c0_4] : memref<1x128xf32, #tpu.memory_space<vmem>>, vector<1x128xf32>
    %4 = vector.broadcast %3 : vector<1x128xf32> to vector<8x128xf32>
    %5 = arith.addf %2, %4 : vector<8x128xf32>
    %cst_5 = arith.constant 0.000000e+00 : f32
    %6 = vector.broadcast %cst_5 : f32 to vector<8x128xf32>
    %7 = arith.maximumf %5, %6 : vector<8x128xf32>
    %c0_6 = arith.constant 0 : index
    %c0_7 = arith.constant 0 : index
    %8 = vector.load %arg4[%c0_6, %c0_7] : memref<1x128xf32, #tpu.memory_space<vmem>>, vector<1x128xf32>
    %9 = vector.broadcast %8 : vector<1x128xf32> to vector<8x128xf32>
    %10 = arith.mulf %7, %9 : vector<8x128xf32>
    %cst_8 = arith.constant dense<0.000000e+00> : vector<8xf32>
    %11 = vector.multi_reduction <add>, %10, %cst_8 [1] : vector<8x128xf32> to vector<8xf32>
    %12 = vector.shape_cast %11 : vector<8xf32> to vector<8x1xf32>
    %c0_9 = arith.constant 0 : index
    %c0_10 = arith.constant 0 : index
    %13 = vector.load %arg5[%c0_9, %c0_10] : memref<1x1xf32, #tpu.memory_space<vmem>>, vector<1x1xf32>
    %14 = vector.broadcast %13 : vector<1x1xf32> to vector<8x1xf32>
    %15 = arith.addf %12, %14 : vector<8x1xf32>
    %c0_11 = arith.constant 0 : index
    %c0_12 = arith.constant 0 : index
    %16 = vector.load %arg6[%c0_11, %c0_12] : memref<8x1xf32, #tpu.memory_space<vmem>>, vector<8x1xf32>
    tpu.vector_store %arg6[%c0_11, %c0_12], %15 {strides = array<i32>} : memref<8x1xf32, #tpu.memory_space<vmem>>, vector<8x1xf32>,
    return
  }
  func.func @transform_0(%arg0: i32) -> (i32, i32) {
    %c0_i32 = arith.constant 0 : i32
    %c0_i32_0 = arith.constant 0 : i32
    return %arg0, %c0_i32 : i32, i32
  }
  func.func @transform_1(%arg0: i32) -> (i32, i32) {
    %c0_i32 = arith.constant 0 : i32
    %c0_i32_0 = arith.constant 0 : i32
    %c0_i32_1 = arith.constant 0 : i32
    return %c0_i32, %c0_i32_0 : i32, i32
  }
  func.func @transform_2(%arg0: i32) -> (i32, i32) {
    %c0_i32 = arith.constant 0 : i32
    %c0_i32_0 = arith.constant 0 : i32
    %c0_i32_1 = arith.constant 0 : i32
    return %c0_i32, %c0_i32_0 : i32, i32
  }
  func.func @transform_3(%arg0: i32) -> (i32, i32) {
    %c0_i32 = arith.constant 0 : i32
    %c0_i32_0 = arith.constant 0 : i32
    %c0_i32_1 = arith.constant 0 : i32
    return %c0_i32, %c0_i32_0 : i32, i32
  }
  func.func @transform_4(%arg0: i32) -> (i32, i32) {
    %c0_i32 = arith.constant 0 : i32
    %c0_i32_0 = arith.constant 0 : i32
    %c0_i32_1 = arith.constant 0 : i32
    return %c0_i32, %c0_i32_0 : i32, i32
  }
  func.func @transform_5(%arg0: i32) -> (i32, i32) {
    %c0_i32 = arith.constant 0 : i32
    %c0_i32_0 = arith.constant 0 : i32
    return %arg0, %c0_i32 : i32, i32
  }
}

</mosaic_0001>

<llo_original>
// kernel: tpu_custom_call.1
$region0: #{tpu_custom_call.1}
  #allocation0 [shape = 'u32[]', space=smem, size = 0x4, offset = 0x4, fixed_abs, tag = 'smem constant byte address 0x4 - core index']
  #allocation1 [shape = 'u32[144,128]{1,0:T(1,128)}', space=vmem, size = 0x12000, scoped, tag = 'internal scratch']
  #allocation2 [shape = 'f32[1,1]{1,0:T(1,128)S(1)}', space=vmem, size = 0x200, scoped, tag = 'scoped memory for tpu_custom_call.1']
  %s0 = inlined_call_operand.hbm [shape: f32[8,150], index: 0, kind: input, shape index: {}]
  %s1 = inlined_call_operand.hbm [shape: f32[150,128], index: 1, kind: input, shape index: {}]
  %s2 = inlined_call_operand.vmem [shape: f32[1,128], index: 2, kind: input, shape index: {}]
  %s3 = inlined_call_operand.vmem [shape: f32[1,128], index: 3, kind: input, shape index: {}]
  %s4 = inlined_call_operand.<no memory space> [shape: f32[1,1], index: 4, kind: input, shape index: {}]
  %s5 = inlined_call_operand.vmem [shape: f32[8,1], index: 5, kind: output, shape index: {}]
  %s6 = sld [smem:[#allocation0]]
  $region38: #{tpu_custom_call.1} parent=0
    _
  %s8 = ssub.s32 1, %s6
  %s9 = scalar_select 0, %s8, %s6
  %v10 = vstv %s4
  %11 = vst [vmem:[#allocation2] sm:$0x1] %v10
  $region1: #{tpu_custom_call.1} parent=0
    #allocation3 [shape = 'u8[8192]{0}', space=vmem, size = 0x2000, scoped, tag = 'input window, operand 0, single buffered']
    #allocation4 [shape = 's32[1]{0}', space=sflag, size = 0x4, scoped, tag = 'scoped memory for tpu_custom_call.1']
    #allocation5 [shape = 'u8[77824]{0}', space=vmem, size = 0x13000, scoped, tag = 'input window, operand 1, single buffered']
    #allocation6 [shape = 's32[1]{0}', space=sflag, size = 0x4, scoped, tag = 'scoped memory for tpu_custom_call.1']
    %12 = vsyncpa [#allocation4], 0
    %13 = vsyncpa [#allocation6], 0
    // Predicated region
    $region2: #{tpu_custom_call.1} parent=1 // pred_check
      _
    $region3: #{tpu_custom_call.1} parent=1 // pred_check_branch
      %15 = sbr.rel (0) target = $region5
    $region4: #{tpu_custom_call.1} parent=1 // pred_region
      %s17 = ssub.s32 256, 256
      %18 = vsyncadd [#allocation4], %s17
      %s20 = sshll.u32 [#allocation3], 4
      %s21 = int_to_ptr.vmem [resolvable:$true] %s20
      %23 = dma.hbm_to_vmem [thread:$0]  %s0, 256, %s21, [#allocation4]
    $region5: #{tpu_custom_call.1} parent=1 // pred_fallthru
      _
    // Predicated region
    $region6: #{tpu_custom_call.1} parent=1 // pred_check
      _
    $region7: #{tpu_custom_call.1} parent=1 // pred_check_branch
      %25 = sbr.rel (0) target = $region9
    $region8: #{tpu_custom_call.1} parent=1 // pred_region
      %s27 = ssub.s32 2432, 2432
      %28 = vsyncadd [#allocation6], %s27
      %s29 = sshll.u32 [#allocation5], 4
      %s30 = int_to_ptr.vmem [resolvable:$true] %s29
      %35 = dma.hbm_to_vmem [thread:$0]  %s1, 2432, %s30, [#allocation6], 128, 128, 8
    $region9: #{tpu_custom_call.1} parent=1 // pred_fallthru
      _
    // Predicated region
    $region10: #{tpu_custom_call.1} parent=1 // pred_check
      _
    $region11: #{tpu_custom_call.1} parent=1 // pred_check_branch
      %37 = sbr.rel (0) target = $region13
    $region12: #{tpu_custom_call.1} parent=1 // pred_region
      _
    $region13: #{tpu_custom_call.1} parent=1 // pred_fallthru
      _
    // Predicated region
    $region14: #{tpu_custom_call.1} parent=1 // pred_check
      _
    $region15: #{tpu_custom_call.1} parent=1 // pred_check_branch
      %39 = sbr.rel (0) target = $region17
    $region16: #{tpu_custom_call.1} parent=1 // pred_region
      _
    $region17: #{tpu_custom_call.1} parent=1 // pred_fallthru
      _
    // Predicated region
    $region18: #{tpu_custom_call.1} parent=1 // pred_check
      _
    $region19: #{tpu_custom_call.1} parent=1 // pred_check_branch
      %41 = sbr.rel (0) target = $region21
    $region20: #{tpu_custom_call.1} parent=1 // pred_region
      _
    $region21: #{tpu_custom_call.1} parent=1 // pred_fallthru
      _
    // Predicated region
    $region22: #{tpu_custom_call.1} parent=1 // pred_check
      _
    $region23: #{tpu_custom_call.1} parent=1 // pred_check_branch
      %43 = sbr.rel (0) target = $region25
    $region24: #{tpu_custom_call.1} parent=1 // pred_region
      %44 = dma.done [#allocation4], 256
    $region25: #{tpu_custom_call.1} parent=1 // pred_fallthru
      _
    // Predicated region
    $region26: #{tpu_custom_call.1} parent=1 // pred_check
      _
    $region27: #{tpu_custom_call.1} parent=1 // pred_check_branch
      %46 = sbr.rel (0) target = $region29
    $region28: #{tpu_custom_call.1} parent=1 // pred_region
      %47 = dma.done [#allocation6], 2432
    $region29: #{tpu_custom_call.1} parent=1 // pred_fallthru
      _
    %v48 = vld [vmem:[#allocation3] sm:$0xff]
    %v49 = vld [vmem:[#allocation3 + $0x8] sm:$0xff]
    %v50 = vld [vmem:[#allocation5] sm:$0xff]
    %v51 = vld [vmem:[#allocation5 + $0x8] sm:$0xff]
    %v52 = vld [vmem:[#allocation5 + $0x10] sm:$0xff]
    %v53 = vld [vmem:[#allocation5 + $0x18] sm:$0xff]
    %v54 = vld [vmem:[#allocation5 + $0x20] sm:$0xff]
    %v55 = vld [vmem:[#allocation5 + $0x28] sm:$0xff]
    %v56 = vld [vmem:[#allocation5 + $0x30] sm:$0xff]
    %v57 = vld [vmem:[#allocation5 + $0x38] sm:$0xff]
    %v58 = vld [vmem:[#allocation5 + $0x40] sm:$0xff]
    %v59 = vld [vmem:[#allocation5 + $0x48] sm:$0xff]
    %v60 = vld [vmem:[#allocation5 + $0x50] sm:$0xff]
    %v61 = vld [vmem:[#allocation5 + $0x58] sm:$0xff]
    %v62 = vld [vmem:[#allocation5 + $0x60] sm:$0xff]
    %v63 = vld [vmem:[#allocation5 + $0x68] sm:$0xff]
    %v64 = vld [vmem:[#allocation5 + $0x70] sm:$0xff]
    %v65 = vld [vmem:[#allocation5 + $0x78] sm:$0xff]
    %v66 = vld [vmem:[#allocation5 + $0x80] sm:$0xff]
    %v67 = vld [vmem:[#allocation5 + $0x88] sm:$0xff]
    %v68 = vld [vmem:[#allocation5 + $0x90] sm:$0x3f]
    %v69 = vld [vmem:[%s2] sm:$0x1]
    %v71 = vlaneseq
    %v72 = vshrl.u32 %v71, 7
    %v73 = vsub.s32 0, %v72
    %v74 = vrot.slane %v69, %v73
    %vm76 = vcmask 179200
    %v78 = vsel %vm76, %v49, 0
    %vm80 = vcmask 1045504
    %v82 = vsel %vm80, %v68, 0
    %84 = vmatprep.subr.mxu0 0.0
    %85 = vmatpush1.msra.mxu0 %v50
    %86 = vmatprep.subr.mxu0 0.0
    %87 = vmatpush1.msra.mxu0 %v51
    %88 = vmatprep.subr.mxu0 0.0
    %89 = vmatpush1.msra.mxu0 %v52
    %90 = vmatprep.subr.mxu0 0.0
    %91 = vmatpush1.msra.mxu0 %v53
    %92 = vmatprep.subr.mxu0 0.0
    %93 = vmatpush1.msra.mxu0 %v54
    %94 = vmatprep.subr.mxu0 0.0
    %95 = vmatpush1.msra.mxu0 %v55
    %96 = vmatprep.subr.mxu0 0.0
    %97 = vmatpush1.msra.mxu0 %v56
    %98 = vmatprep.subr.mxu0 0.0
    %99 = vmatpush1.msra.mxu0 %v57
    %100 = vmatprep.subr.mxu0 0.0
    %101 = vmatpush1.msra.mxu0 %v58
    %102 = vmatprep.subr.mxu0 0.0
    %103 = vmatpush1.msra.mxu0 %v59
    %104 = vmatprep.subr.mxu0 0.0
    %105 = vmatpush1.msra.mxu0 %v60
    %106 = vmatprep.subr.mxu0 0.0
    %107 = vmatpush1.msra.mxu0 %v61
    %108 = vmatprep.subr.mxu0 0.0
    %109 = vmatpush1.msra.mxu0 %v62
    %110 = vmatprep.subr.mxu0 0.0
    %111 = vmatpush1.msra.mxu0 %v63
    %112 = vmatprep.subr.mxu0 0.0
    %113 = vmatpush1.msra.mxu0 %v64
    %114 = vmatprep.subr.mxu0 0.0
    %115 = vmatpush1.msra.mxu0 %v65
    %116 = vmatprep.subr.mxu0 0.0
    %117 = vmatpush1.msra.mxu0 %v66
    %118 = vmatprep.subr.mxu0 0.0
    %119 = vmatpush1.msra.mxu0 %v67
    %120 = vmatprep.subr.mxu0 0.0
    %121 = vmatpush1.msra.mxu0 %v82
    %122 = vmatprep.subr.mxu0 0.0
    %123 = vmatpush1.msra.mxu0 0.0
    %124 = vmatprep.subr.mxu0 0.0
    %125 = vmatpush1.msra.mxu0 0.0
    %126 = vmatprep.subr.mxu0 0.0
    %127 = vmatpush1.msra.mxu0 0.0
    %128 = vmatprep.subr.mxu0 0.0
    %129 = vmatpush1.msra.mxu0 0.0
    %130 = vmatprep.subr.mxu0 0.0
    %131 = vmatpush1.msra.mxu0 0.0
    %132 = vmatprep.subr.mxu0 0.0
    %133 = vmatpush1.msra.mxu0 0.0
    %134 = vmatprep.subr.mxu0 0.0
    %135 = vmatpush1.msra.mxu0 0.0
    %136 = vmatprep.subr.mxu0 0.0
    %137 = vmatpush1.msra.mxu0 0.0
    %138 = vmatprep.subr.mxu0 0.0
    %139 = vmatpush1.msra.mxu0 0.0
    %140 = vmatprep.subr.mxu0 0.0
    %141 = vmatpush1.msra.mxu0 0.0
    %142 = vmatprep.subr.mxu0 0.0
    %143 = vmatpush1.msra.mxu0 0.0
    %144 = vmatprep.subr.mxu0 0.0
    %145 = vmatpush1.msra.mxu0 0.0
    %146 = vmatprep.subr.mxu0 0.0
    %147 = vmatpush1.msra.mxu0 0.0
    %148 = vmatprep.mubr.f32.mxu0 %v78
    %149 = vmatmul.mubr.f32.gmra.mrb[0].mxu0 %v48
    %v150 = vpop.f32.mrb[0].mxu0
    %v151 = vadd.f32 %v74, %v150
    %v152 = vpop.f32.mrb[0].mxu0
    %153 = vdwg.mxu0
    %v154 = vmax.f32 %v151, 0.0
    %v155 = vld [vmem:[%s3] sm:$0x1]
    %v157 = vlaneseq
    %v158 = vshrl.u32 %v157, 7
    %v159 = vsub.s32 0, %v158
    %v160 = vrot.slane %v155, %v159
    %v162 = vmul.f32 %v154, %v160
    %163 = vadd.xlane.f32.xlu0 %v162
    %v164 = vpop.xlane.xlu0 %163
    %v165 = vld [vmem:[#allocation2] sm:$0x1]
    %v167 = vlaneseq
    %v168 = vshrl.u32 %v167, 7
    %v169 = vsub.s32 0, %v168
    %v170 = vrot.slane %v165, %v169
    %v172 = vadd.f32 %v164, %v170
    %vm173 = vcmask 7168
    %174 = vst.msk [vmem:[%s5] sm:$0xff] %vm173, %v172
    // Predicated region
    $region30: #{tpu_custom_call.1} parent=1 // pred_check
      _
    $region31: #{tpu_custom_call.1} parent=1 // pred_check_branch
      %176 = sbr.rel (0) target = $region33
    $region32: #{tpu_custom_call.1} parent=1 // pred_region
      _
    $region33: #{tpu_custom_call.1} parent=1 // pred_fallthru
      _
    // Predicated region
    $region34: #{tpu_custom_call.1} parent=1 // pred_check
      _
    $region35: #{tpu_custom_call.1} parent=1 // pred_check_branch
      %178 = sbr.rel (0) target = $region37
    $region36: #{tpu_custom_call.1} parent=1 // pred_region
      _
    $region37: #{tpu_custom_call.1} parent=1 // pred_fallthru
      _
    %179 = vsyncpa [#allocation4], 1
    %180 = vsyncpa [#allocation6], 1

</llo_original>
